<compile_context>
chip_gen: v7x
topology: tpu7x:2x2x1
jax: 0.10.0
libtpu: 0.0.40
codegen_flags: <defaults>
</compile_context>

<pallas_src>
import functools

import jax
import jax.numpy as jnp
from jax.experimental import pallas as pl
from jax.experimental.pallas import tpu as pltpu


# ----------------------------------------------------------------------------- kernel

def cem_kernel(x_ref, g_ref, w_ref, b_ref, o_ref):
    # x_ref: (1, TS, Cc)  bf16   concat of [C4_nhwc, up2(C5)_nhwc] channels (Cc = C0 + C1)
    # g_ref: (1, 1, F)    f32    per-batch global branch (already ReLU'd)
    # w_ref: (Cc, 2F)     bf16   block-diagonal [[W1, 0], [0, W2]] (folded BN)
    # b_ref: (1, 2F)      f32    concat [b1, b2] (folded BN)
    # o_ref: (1, TS, F)   bf16
    fea = o_ref.shape[-1]
    y = jnp.dot(x_ref[0], w_ref[...], preferred_element_type=jnp.float32)   # (TS, 2F) on MXU
    y = jnp.maximum(y + b_ref[...], 0.0)                                    # per-branch ReLU
    # lane split at F=128 is vreg-aligned
    o_ref[0] = (y[:, :fea] + y[:, fea:] + g_ref[0]).astype(o_ref.dtype)


def _pick_ts(hw, n_batch, cap=2048):
    """Largest row tile that fits the VMEM budget; keep >=2 parallel grid steps for v7x."""
    ts = hw
    if ts > cap:
        for cand in range(cap - cap % 8, 7, -8):      # multiple-of-8 divisor of hw
            if hw % cand == 0:
                ts = cand
                break
    if n_batch * (hw // ts) < 2 and hw % 16 == 0:     # give both v7x TensorCores work
        ts = hw // 2
    return ts


def cem_pallas(x_cat, g, w_cat, b_cat, *, out_dtype=jnp.bfloat16):
    N, HW, Cc = x_cat.shape
    F = g.shape[-1]
    ts = _pick_ts(HW, N)
    assert HW % ts == 0 and (ts % 8 == 0 or ts == HW)
    grid = (N, HW // ts)

    return pl.pallas_call(
        cem_kernel,
        out_shape=jax.ShapeDtypeStruct((N, HW, F), out_dtype),
        grid_spec=pltpu.PrefetchScalarGridSpec(
            num_scalar_prefetch=0,
            grid=grid,
            in_specs=[
                pl.BlockSpec((1, ts, Cc), lambda b, s: (b, s, 0)),   # fused input tile
                pl.BlockSpec((1, 1, F), lambda b, s: (b, 0, 0)),     # global branch (per batch)
                pl.BlockSpec((Cc, 2 * F), lambda b, s: (0, 0)),      # block-diag weight
                pl.BlockSpec((1, 2 * F), lambda b, s: (0, 0)),       # concat bias
            ],
            out_specs=pl.BlockSpec((1, ts, F), lambda b, s: (b, s, 0)),
        ),
        compiler_params=pltpu.CompilerParams(
            dimension_semantics=("parallel", "parallel"),
            # ts<=2048: per-step <~1.5 MiB double-buffered; 32 MiB is safe on v5e/v6e/v7x
            # (v7x physical VMEM is only 64 MiB, so do NOT size tiles to the v6e 128 MiB).
            vmem_limit_bytes=32 * 1024 * 1024,
        ),
    )(x_cat, g, w_cat, b_cat)


# ----------------------------------------------------------------------------- glue

def fold_bn(w, gamma, beta, mean, var, eps=1e-5):
    # 1x1 conv weight as (Cin, Cout); BN folds into per-output-channel scale/bias.
    scale = gamma / jnp.sqrt(var + eps)
    return w * scale[None, :], beta - mean * scale


def make_basicconv_params(key, cin, cout):
    k1, k2, k3, k4, k5 = jax.random.split(key, 5)
    wconv = jax.random.normal(k1, (cin, cout), jnp.float32) * 0.1
    gamma = 1.0 + 0.1 * jax.random.normal(k2, (cout,), jnp.float32)
    beta = 0.1 * jax.random.normal(k3, (cout,), jnp.float32)
    mean = 0.1 * jax.random.normal(k4, (cout,), jnp.float32)
    var = jnp.abs(jax.random.normal(k5, (cout,), jnp.float32)) + 0.5
    return fold_bn(wconv, gamma, beta, mean, var)


@jax.jit
def cem_forward(c4_nchw, c5_nchw, w_cat_bf, b_cat, w3, b3):
    """Full CEM forward. NCHW in -> NHWC (N,H,W,F) bf16 out."""
    N, C0, H, W = c4_nchw.shape
    _, C1, _, _ = c5_nchw.shape
    fea = w3.shape[1]

    c4 = jnp.transpose(c4_nchw, (0, 2, 3, 1))                    # (N,H,W,C0)
    c5 = jnp.transpose(c5_nchw, (0, 2, 3, 1))                    # (N,h,w,C1)

    # Nearest 2x upsample commutes with the 1x1 conv + ReLU; done here and fused by XLA
    # into the concat producer (no standalone upsampled tensor in HBM).
    c5_up = jnp.repeat(jnp.repeat(c5.astype(jnp.bfloat16), 2, axis=1), 2, axis=2)
    x_cat = jnp.concatenate([c4.astype(jnp.bfloat16), c5_up], axis=-1)
    x_cat = x_cat.reshape(N, H * W, C0 + C1)                     # (N, HW, 48) bf16

    # Global branch: GAP over raw C5 (f32) then tiny (N,C1)@(C1,F); broadcast inside kernel.
    gap = jnp.mean(c5, axis=(1, 2))                              # (N, C1) f32
    g = jnp.maximum(gap @ w3 + b3, 0.0).reshape(N, 1, fea).astype(jnp.float32)

    out_flat = cem_pallas(x_cat, g, w_cat_bf, b_cat)
    return out_flat.reshape(N, H, W, fea)


# ----------------------------------------------------------------------------- demo

if __name__ == "__main__":
    key = jax.random.PRNGKey(0)
    keys = jax.random.split(key, 8)

    channels = (16, 32)     # (channels[0], channels[1])
    fea = 128               # fea_channel
    N, H, W = 2, 16, 16     # C4 spatial
    h, w = H // 2, W // 2   # C5 spatial (stride-2 feature map)

    # PyTorch-convention NCHW inputs
    c4_nchw = jax.random.normal(keys[0], (N, channels[0], H, W), jnp.float32)
    c5_nchw = jax.random.normal(keys[1], (N, channels[1], h, w), jnp.float32)

    # Parameters (BN folded)
    w1, b1 = make_basicconv_params(keys[2], channels[0], fea)   # cv1
    w2, b2 = make_basicconv_params(keys[3], channels[1], fea)   # cv2 (scale_factor=2)
    w3, b3 = make_basicconv_params(keys[4], channels[1], fea)   # cv3 (global branch)

    # Block-diagonal fused weight / concatenated bias for the two per-pixel branches.
    Cc = channels[0] + channels[1]
    w_cat = jnp.zeros((Cc, 2 * fea), jnp.float32)
    w_cat = w_cat.at[:channels[0], :fea].set(w1)
    w_cat = w_cat.at[channels[0]:, fea:].set(w2)
    w_cat_bf = w_cat.astype(jnp.bfloat16)
    b_cat = jnp.concatenate([b1, b2]).reshape(1, 2 * fea)        # f32

    out = cem_forward(c4_nchw, c5_nchw, w_cat_bf, b_cat, w3, b3)
    jax.block_until_ready(out)

    # ------------------------------------------------------------------ pure-JAX reference
    c4 = jnp.transpose(c4_nchw, (0, 2, 3, 1)).astype(jnp.bfloat16)
    c5 = jnp.transpose(c5_nchw, (0, 2, 3, 1))
    c5_up = jnp.repeat(jnp.repeat(c5.astype(jnp.bfloat16), 2, axis=1), 2, axis=2)
    a_ref = jnp.maximum(
        jnp.einsum("nhwc,cf->nhwf", c4, w1.astype(jnp.bfloat16),
                   preferred_element_type=jnp.float32) + b1, 0.0)
    c_ref = jnp.maximum(
        jnp.einsum("nhwc,cf->nhwf", c5_up, w2.astype(jnp.bfloat16),
                   preferred_element_type=jnp.float32) + b2, 0.0)
    gap = jnp.mean(c5, axis=(1, 2))
    g_ref = jnp.maximum(gap @ w3 + b3, 0.0).reshape(N, 1, 1, fea)
    ref = a_ref + c_ref + g_ref

    assert jnp.allclose(out.astype(jnp.float32), ref, atol=5e-2, rtol=5e-2), \
        "mismatch vs reference"

    print("KERNEL_OK")
</pallas_src>

<mosaic_0001>
module attributes {stable_mosaic.version = 11 : i64} {
  func.func @cem_kernel(%arg0: i32, %arg1: i32, %arg2: memref<1x256x48xbf16, #tpu.memory_space<vmem>>, %arg3: memref<1x1x128xf32, #tpu.memory_space<vmem>>, %arg4: memref<48x256xbf16, #tpu.memory_space<vmem>>, %arg5: memref<1x256xf32, #tpu.memory_space<vmem>>, %arg6: memref<1x256x128xbf16, #tpu.memory_space<vmem>>) attributes {dimension_semantics = [#tpu.dimension_semantics<parallel>, #tpu.dimension_semantics<parallel>], iteration_bounds = array<i64: 2, 1>, scalar_prefetch = 0 : i64, scratch_operands = 0 : i64, tpu.core_type = #tpu.core_type<tc>, window_params = [{transform_indices = @transform_0, window_bounds = array<i64: 1, 256, 48>}, {transform_indices = @transform_1, window_bounds = array<i64: 1, 1, 128>}, {pipeline_mode = #tpu.pipeline_mode<synchronous>, transform_indices = @transform_2, window_bounds = array<i64: 48, 256>}, {pipeline_mode = #tpu.pipeline_mode<synchronous>, transform_indices = @transform_3, window_bounds = array<i64: 1, 256>}, {transform_indices = @transform_4, window_bounds = array<i64: 1, 256, 128>}]} {
    %c0 = arith.constant 0 : index
    %c0_0 = arith.constant 0 : index
    %c0_1 = arith.constant 0 : index
    %0 = vector.load %arg2[%c0, %c0_0, %c0_1] : memref<1x256x48xbf16, #tpu.memory_space<vmem>>, vector<1x256x48xbf16>
    %1 = vector.shape_cast %0 : vector<1x256x48xbf16> to vector<256x48xbf16>
    %c0_2 = arith.constant 0 : index
    %c0_3 = arith.constant 0 : index
    %2 = vector.load %arg4[%c0_2, %c0_3] : memref<48x256xbf16, #tpu.memory_space<vmem>>, vector<48x256xbf16>
    %cst = arith.constant dense<0.000000e+00> : vector<256x256xf32>
    %3 = tpu.matmul %1, %2, %cst {dimension_numbers = #tpu.dot_dimension_numbers<[1], [0], [0], [1], [0, 0, 1, 1], [], []>} : vector<256x48xbf16>, vector<48x256xbf16>, vector<256x256xf32> -> vector<256x256xf32>
    %c0_4 = arith.constant 0 : index
    %c0_5 = arith.constant 0 : index
    %4 = vector.load %arg5[%c0_4, %c0_5] : memref<1x256xf32, #tpu.memory_space<vmem>>, vector<1x256xf32>
    %5 = vector.broadcast %4 : vector<1x256xf32> to vector<256x256xf32>
    %6 = arith.addf %3, %5 : vector<256x256xf32>
    %cst_6 = arith.constant 0.000000e+00 : f32
    %7 = vector.broadcast %cst_6 : f32 to vector<256x256xf32>
    %8 = arith.maximumf %6, %7 : vector<256x256xf32>
    %9 = vector.extract_strided_slice %8 {offsets = [0, 0], sizes = [256, 128], strides = [1, 1]} : vector<256x256xf32> to vector<256x128xf32>
    %10 = vector.extract_strided_slice %8 {offsets = [0, 128], sizes = [256, 128], strides = [1, 1]} : vector<256x256xf32> to vector<256x128xf32>
    %11 = arith.addf %9, %10 : vector<256x128xf32>
    %c0_7 = arith.constant 0 : index
    %c0_8 = arith.constant 0 : index
    %c0_9 = arith.constant 0 : index
    %12 = vector.load %arg3[%c0_7, %c0_8, %c0_9] : memref<1x1x128xf32, #tpu.memory_space<vmem>>, vector<1x1x128xf32>
    %13 = vector.shape_cast %12 : vector<1x1x128xf32> to vector<1x128xf32>
    %14 = vector.broadcast %13 : vector<1x128xf32> to vector<256x128xf32>
    %15 = arith.addf %11, %14 : vector<256x128xf32>
    %16 = arith.truncf %15 : vector<256x128xf32> to vector<256x128xbf16>
    %c0_10 = arith.constant 0 : index
    %c0_11 = arith.constant 0 : index
    %c0_12 = arith.constant 0 : index
    %17 = vector.load %arg6[%c0_10, %c0_11, %c0_12] : memref<1x256x128xbf16, #tpu.memory_space<vmem>>, vector<1x256x128xbf16>
    %18 = vector.shape_cast %17 : vector<1x256x128xbf16> to vector<256x128xbf16>
    %19 = vector.shape_cast %16 : vector<256x128xbf16> to vector<1x256x128xbf16>
    tpu.vector_store %arg6[%c0_10, %c0_11, %c0_12], %19 {strides = array<i32>} : memref<1x256x128xbf16, #tpu.memory_space<vmem>>, vector<1x256x128xbf16>,
    return
  }
  func.func @transform_0(%arg0: i32, %arg1: i32) -> (i32, i32, i32) {
    %c0_i32 = arith.constant 0 : i32
    %c0_i32_0 = arith.constant 0 : i32
    return %arg0, %arg1, %c0_i32 : i32, i32, i32
  }
  func.func @transform_1(%arg0: i32, %arg1: i32) -> (i32, i32, i32) {
    %c0_i32 = arith.constant 0 : i32
    %c0_i32_0 = arith.constant 0 : i32
    %c0_i32_1 = arith.constant 0 : i32
    return %arg0, %c0_i32, %c0_i32_0 : i32, i32, i32
  }
  func.func @transform_2(%arg0: i32, %arg1: i32) -> (i32, i32) {
    %c0_i32 = arith.constant 0 : i32
    %c0_i32_0 = arith.constant 0 : i32
    %c0_i32_1 = arith.constant 0 : i32
    return %c0_i32, %c0_i32_0 : i32, i32
  }
  func.func @transform_3(%arg0: i32, %arg1: i32) -> (i32, i32) {
    %c0_i32 = arith.constant 0 : i32
    %c0_i32_0 = arith.constant 0 : i32
    %c0_i32_1 = arith.constant 0 : i32
    return %c0_i32, %c0_i32_0 : i32, i32
  }
  func.func @transform_4(%arg0: i32, %arg1: i32) -> (i32, i32, i32) {
    %c0_i32 = arith.constant 0 : i32
    %c0_i32_0 = arith.constant 0 : i32
    return %arg0, %arg1, %c0_i32 : i32, i32, i32
  }
}

</mosaic_0001>

<llo_original>
// kernel: cem_forward.1
$region0: #{cem_forward.1}
  #allocation0 [shape = 'u32[]', space=smem, size = 0x4, offset = 0x4, fixed_abs, tag = 'smem constant byte address 0x4 - core index']
  #allocation1 [shape = 'u32[144,128]{1,0:T(1,128)}', space=vmem, size = 0x12000, scoped, tag = 'internal scratch']
  %s0 = inlined_call_operand.vmem [shape: bf16[2,256,48], index: 0, kind: input, shape index: {}]
  %s1 = inlined_call_operand.vmem [shape: f32[2,1,128], index: 1, kind: input, shape index: {}]
  %s2 = inlined_call_operand.vmem [shape: bf16[48,256], index: 2, kind: input, shape index: {}]
  %s3 = inlined_call_operand.vmem [shape: f32[1,256], index: 3, kind: input, shape index: {}]
  %s4 = inlined_call_operand.hbm [shape: bf16[2,256,128], index: 4, kind: output, shape index: {}]
  %s5 = sld [smem:[#allocation0]]
  $region49: #{cem_forward.1} parent=0
    _
  %s7 = ssub.s32 1, %s5
  %s8 = scalar_select 0, %s7, %s5
  $region1: #{cem_forward.1} parent=0
    #allocation2 [shape = 'u8[131072]{0}', space=vmem, size = 0x20000, scoped, tag = 'output window, operand 0']
    #allocation3 [shape = 's32[2]{0}', space=sflag, size = 0x8, scoped, tag = 'scoped memory for cem_forward.1']
    %9 = vsyncpa [#allocation3], 0
    %s10 = scalar_lea.sflag [#allocation3], 1
    %11 = vsyncpa %s10, 0
    loop: start=0, step=1, limit=4
    $region2: #{cem_forward.1} parent=1 // loop_pre_header
      _
    $region3: #{cem_forward.1} parent=1 // loop_header
      %s13 = sphi 0, %s17
      %p14 = scmp.ge.s32.totalorder %s13, 4
      %s20 = sphi 0, %s32
      %s21 = sphi 0, %s28
      %s22 = sphi 0, %s20
      %s23 = sphi 0, %s21
      %s24 = sphi 0, %s22
      %s25 = sphi 0, %s23
      %s37 = sphi 0, %s39
      %s40 = sphi 0, %s37
      %s41 = sphi 0, %s40
      %s57 = sphi 0, %s41
      %s63 = sphi 0, %s65
      %s66 = sphi 0, %s63
      %s67 = sphi 0, %s66
      %s83 = sphi 0, %s67
      %s87 = sphi 0, %s87
      %s89 = sphi 0, %s87
      %s90 = sphi 0, %s89
      %s104 = sphi 0, %s90
      %s108 = sphi 0, %s108
      %s110 = sphi 0, %s108
      %s111 = sphi 0, %s110
      %s125 = sphi 0, %s111
      %s133 = sphi 0, %s135
      %s136 = sphi 0, %s133
      %s137 = sphi 0, %s136
      %s153 = sphi 0, %s137
    $region4: #{cem_forward.1} parent=1 // loop_header_branch
      %16 = sbr.rel (%p14) target = $region8
    $region5: #{cem_forward.1} parent=1 // loop_body
      %s18 = ssub.s32 %s13, 1
      %s19 = ssub.s32 %s13, 2
      %s26 = sadd.s32 1, %s21
      %p27 = scmp.ge.s32.totalorder %s26, 1
      %s28 = scalar_select %p27, 0, %s26
      %s29 = sadd.s32 1, %s20
      %s30 = scalar_select %p27, %s29, %s20
      %p31 = scmp.ge.s32.totalorder %s30, 2
      %s32 = scalar_select %p31, 0, %s30
      %s33 = ssub.s32 %s20, %s32
      %s34 = ssub.s32 %s21, %s28
      %s35 = sor.u32 %s33, %s34
      %p36 = scmp.eq.s32.totalorder %s35, 0
      %s38 = sadd.s32 %s37, 1
      %s39 = scalar_select %p36, %s37, %s38
      %p42 = pneg %p36
      %p43 = scmp.eq.s32.totalorder %s13, 1
      %p44 = por %p42, %p43
      %p45 = scmp.ne.s32.totalorder %s37, %s40
      %p46 = scmp.eq.s32.totalorder %s13, 0
      %p47 = por %p45, %p46
      %p48 = scmp.ne.s32.totalorder %s37, %s40
      %p49 = scmp.eq.s32.totalorder %s18, 1
      %p50 = por %p48, %p49
      %p51 = scmp.ne.s32.totalorder %s40, %s41
      %p52 = scmp.eq.s32.totalorder %s18, 0
      %p53 = por %p51, %p52
      %p54 = scmp.ne.s32.totalorder %s40, %s41
      %p55 = scmp.eq.s32.totalorder %s19, 1
      %p56 = por %p54, %p55
      %p58 = scmp.ne.s32.totalorder %s41, %s57
      %p59 = scmp.eq.s32.totalorder %s19, 0
      %p60 = por %p58, %p59
      %s61 = ssub.s32 %s20, %s32
      %p62 = scmp.eq.s32.totalorder %s61, 0
      %s64 = sadd.s32 %s63, 1
      %s65 = scalar_select %p62, %s63, %s64
      %p68 = pneg %p62
      %p69 = scmp.eq.s32.totalorder %s13, 1
      %p70 = por %p68, %p69
      %p71 = scmp.ne.s32.totalorder %s63, %s66
      %p72 = scmp.eq.s32.totalorder %s13, 0
      %p73 = por %p71, %p72
      %p74 = scmp.ne.s32.totalorder %s63, %s66
      %p75 = scmp.eq.s32.totalorder %s18, 1
      %p76 = por %p74, %p75
      %p77 = scmp.ne.s32.totalorder %s66, %s67
      %p78 = scmp.eq.s32.totalorder %s18, 0
      %p79 = por %p77, %p78
      %p80 = scmp.ne.s32.totalorder %s66, %s67
      %p81 = scmp.eq.s32.totalorder %s19, 1
      %p82 = por %p80, %p81
      %p84 = scmp.ne.s32.totalorder %s67, %s83
      %p85 = scmp.eq.s32.totalorder %s19, 0
      %p86 = por %p84, %p85
      %s88 = sadd.s32 %s87, 1
      %p91 = scmp.eq.s32.totalorder %s13, 1
      %p92 = scmp.ne.s32.totalorder %s87, %s89
      %p93 = scmp.eq.s32.totalorder %s13, 0
      %p94 = por %p92, %p93
      %p95 = scmp.ne.s32.totalorder %s87, %s89
      %p96 = scmp.eq.s32.totalorder %s18, 1
      %p97 = por %p95, %p96
      %p98 = scmp.ne.s32.totalorder %s89, %s90
      %p99 = scmp.eq.s32.totalorder %s18, 0
      %p100 = por %p98, %p99
      %p101 = scmp.ne.s32.totalorder %s89, %s90
      %p102 = scmp.eq.s32.totalorder %s19, 1
      %p103 = por %p101, %p102
      %p105 = scmp.ne.s32.totalorder %s90, %s104
      %p106 = scmp.eq.s32.totalorder %s19, 0
      %p107 = por %p105, %p106
      %s109 = sadd.s32 %s108, 1
      %p112 = scmp.eq.s32.totalorder %s13, 1
      %p113 = scmp.ne.s32.totalorder %s108, %s110
      %p114 = scmp.eq.s32.totalorder %s13, 0
      %p115 = por %p113, %p114
      %p116 = scmp.ne.s32.totalorder %s108, %s110
      %p117 = scmp.eq.s32.totalorder %s18, 1
      %p118 = por %p116, %p117
      %p119 = scmp.ne.s32.totalorder %s110, %s111
      %p120 = scmp.eq.s32.totalorder %s18, 0
      %p121 = por %p119, %p120
      %p122 = scmp.ne.s32.totalorder %s110, %s111
      %p123 = scmp.eq.s32.totalorder %s19, 1
      %p124 = por %p122, %p123
      %p126 = scmp.ne.s32.totalorder %s111, %s125
      %p127 = scmp.eq.s32.totalorder %s19, 0
      %p128 = por %p126, %p127
      %s129 = ssub.s32 %s20, %s32
      %s130 = ssub.s32 %s21, %s28
      %s131 = sor.u32 %s129, %s130
      %p132 = scmp.eq.s32.totalorder %s131, 0
      %s134 = sadd.s32 %s133, 1
      %s135 = scalar_select %p132, %s133, %s134
      %p138 = pneg %p132
      %p139 = scmp.eq.s32.totalorder %s13, 1
      %p140 = por %p138, %p139
      %p141 = scmp.ne.s32.totalorder %s133, %s136
      %p142 = scmp.eq.s32.totalorder %s13, 0
      %p143 = por %p141, %p142
      %p144 = scmp.ne.s32.totalorder %s133, %s136
      %p145 = scmp.eq.s32.totalorder %s18, 1
      %p146 = por %p144, %p145
      %p147 = scmp.ne.s32.totalorder %s136, %s137
      %p148 = scmp.eq.s32.totalorder %s18, 0
      %p149 = por %p147, %p148
      %p150 = scmp.ne.s32.totalorder %s136, %s137
      %p151 = scmp.eq.s32.totalorder %s19, 1
      %p152 = por %p150, %p151
      %p154 = scmp.ne.s32.totalorder %s137, %s153
      %p155 = scmp.eq.s32.totalorder %s19, 0
      %p156 = por %p154, %p155
      %p157 = scmp.le.s32.totalorder 1, %s13
      %p158 = scmp.lt.s32.totalorder %s13, 3
      %p159 = pnand %p157, %p158
      %p160 = pneg %p159
      // Predicated region
      $region9: #{cem_forward.1} parent=5 // pred_check
        _
      $region10: #{cem_forward.1} parent=5 // pred_check_branch
        %162 = sbr.rel (%p159) target = $region12
      $region11: #{cem_forward.1} parent=5 // pred_region
        %s163 = ssub.s32 %s13, 1
        // Predicated region
        $region13: #{cem_forward.1} parent=11 // pred_check
          %p164 = pneg %p100
        $region14: #{cem_forward.1} parent=11 // pred_check_branch
          %166 = sbr.rel (%p164) target = $region16
        $region15: #{cem_forward.1} parent=11 // pred_region
          _
        $region16: #{cem_forward.1} parent=11 // pred_fallthru
          _
        // Predicated region
        $region17: #{cem_forward.1} parent=11 // pred_check
          %p167 = pneg %p121
        $region18: #{cem_forward.1} parent=11 // pred_check_branch
          %169 = sbr.rel (%p167) target = $region20
        $region19: #{cem_forward.1} parent=11 // pred_region
          _
        $region20: #{cem_forward.1} parent=11 // pred_fallthru
          _
      $region12: #{cem_forward.1} parent=5 // pred_fallthru
        _
      %p170 = scmp.lt.s32.totalorder %s13, 2
      // Predicated region
      $region21: #{cem_forward.1} parent=5 // pred_check
        %p171 = pneg %p170
      $region22: #{cem_forward.1} parent=5 // pred_check_branch
        %173 = sbr.rel (%p171) target = $region24
      $region23: #{cem_forward.1} parent=5 // pred_region
        // Predicated region
        $region25: #{cem_forward.1} parent=23 // pred_check
          %p174 = pneg %p47
        $region26: #{cem_forward.1} parent=23 // pred_check_branch
          %176 = sbr.rel (%p174) target = $region28
        $region27: #{cem_forward.1} parent=23 // pred_region
          %s177 = smul.u32 32, %s21
          %p178 = scmp.lt.s32.totalorder %s20, 1
          %s179 = scalar_select %p178, %s20, 1
          %p180 = scmp.lt.s32.totalorder %s177, 31
          %s181 = scalar_select %p180, %s177, 31
          %s182 = smul.addr %s179, 32
          %s183 = sadd.s32 %s181, %s182
          %s184 = smul.addr %s183, 4
          %s185 = scalar_lea.vmem %s0, %s184
          %s186 = smul.u32 32, %s21
        $region28: #{cem_forward.1} parent=23 // pred_fallthru
          _
        // Predicated region
        $region29: #{cem_forward.1} parent=23 // pred_check
          %p187 = pneg %p73
        $region30: #{cem_forward.1} parent=23 // pred_check_branch
          %189 = sbr.rel (%p187) target = $region32
        $region31: #{cem_forward.1} parent=23 // pred_region
          %p190 = scmp.lt.s32.totalorder %s20, 1
          %s191 = scalar_select %p190, %s20, 1
          %s192 = scalar_lea.vmem %s1, %s191
        $region32: #{cem_forward.1} parent=23 // pred_fallthru
          _
      $region24: #{cem_forward.1} parent=5 // pred_fallthru
        _
      %p193 = scmp.le.s32.totalorder 1, %s13
      %p194 = scmp.lt.s32.totalorder %s13, 3
      %p195 = pnand %p193, %p194
      %p196 = pneg %p195
      // Predicated region
      $region33: #{cem_forward.1} parent=5 // pred_check
        _
      $region34: #{cem_forward.1} parent=5 // pred_check_branch
        %198 = sbr.rel (%p195) target = $region36
      $region35: #{cem_forward.1} parent=5 // pred_region
        %s199 = ssub.s32 %s13, 1
        %s200 = smul.u32 32, %s23
        %p201 = scmp.lt.s32.totalorder %s22, 1
        %s202 = scalar_select %p201, %s22, 1
        %p203 = scmp.lt.s32.totalorder %s200, 31
        %s204 = scalar_select %p203, %s200, 31
        %s205 = smul.addr %s202, 32
        %s206 = sadd.s32 %s204, %s205
        %s207 = smul.addr %s206, 4
        %s208 = scalar_lea.vmem %s0, %s207
        %p209 = pneg %p53
        %p210 = pneg %p50
        %p211 = scmp.lt.s32.totalorder %s22, 1
        %s212 = scalar_select %p211, %s22, 1
        %s213 = scalar_lea.vmem %s1, %s212
        %p214 = pneg %p79
        %p215 = pneg %p76
        %p216 = pneg %p100
        %p217 = pneg %p97
        %p218 = pneg %p121
        %p219 = pneg %p118
        %p220 = pneg %p149
        %p221 = pneg %p146
        %s222 = sand.u32 %s136, 1
        %s223 = scalar_lea.sflag [#allocation3], %s222
        %s224 = sand.u32 %s136, 1
        %s225 = smul.addr %s224, 128
        %s226 = scalar_lea.vmem [#allocation2], %s225
        %s227 = smul.u32 32, %s23
        %p228 = scmp.lt.s32.totalorder %s22, 1
        %s229 = scalar_select %p228, %s22, 1
        %p230 = scmp.lt.s32.totalorder %s227, 31
        %s231 = scalar_select %p230, %s227, 31
        %s232 = smul.addr %s229, 32
        %s233 = sadd.s32 %s231, %s232
        %s234 = smul.addr %s233, 4
        %s235 = scalar_lea.vmem %s0, %s234
        %s236 = smul.u32 32, %s23
        %p237 = scmp.lt.s32.totalorder %s22, 1
        %s238 = scalar_select %p237, %s22, 1
        %s239 = scalar_lea.vmem %s1, %s238
        %s240 = smul.u32 32, %s23
        %v242 = vld [vmem:[%s235] sm:$0xf]
        %v243 = vld [vmem:[%s235 + $0x4] sm:$0xf]
        %v244 = vld [vmem:[%s235 + $0x8] sm:$0xf]
        %v245 = vld [vmem:[%s235 + $0xc] sm:$0xf]
        %v246 = vld [vmem:[%s235 + $0x10] sm:$0xf]
        %v247 = vld [vmem:[%s235 + $0x14] sm:$0xf]
        %v248 = vld [vmem:[%s235 + $0x18] sm:$0xf]
        %v249 = vld [vmem:[%s235 + $0x1c] sm:$0xf]
        %v250 = vld [vmem:[%s235 + $0x20] sm:$0xf]
        %v251 = vld [vmem:[%s235 + $0x24] sm:$0xf]
        %v252 = vld [vmem:[%s235 + $0x28] sm:$0xf]
        %v253 = vld [vmem:[%s235 + $0x2c] sm:$0xf]
        %v254 = vld [vmem:[%s235 + $0x30] sm:$0xf]
        %v255 = vld [vmem:[%s235 + $0x34] sm:$0xf]
        %v256 = vld [vmem:[%s235 + $0x38] sm:$0xf]
        %v257 = vld [vmem:[%s235 + $0x3c] sm:$0xf]
        %v258 = vld [vmem:[%s235 + $0x40] sm:$0xf]
        %v259 = vld [vmem:[%s235 + $0x44] sm:$0xf]
        %v260 = vld [vmem:[%s235 + $0x48] sm:$0xf]
        %v261 = vld [vmem:[%s235 + $0x4c] sm:$0xf]
        %v262 = vld [vmem:[%s235 + $0x50] sm:$0xf]
        %v263 = vld [vmem:[%s235 + $0x54] sm:$0xf]
        %v264 = vld [vmem:[%s235 + $0x58] sm:$0xf]
        %v265 = vld [vmem:[%s235 + $0x5c] sm:$0xf]
        %v266 = vld [vmem:[%s235 + $0x60] sm:$0xf]
        %v267 = vld [vmem:[%s235 + $0x64] sm:$0xf]
        %v268 = vld [vmem:[%s235 + $0x68] sm:$0xf]
        %v269 = vld [vmem:[%s235 + $0x6c] sm:$0xf]
        %v270 = vld [vmem:[%s235 + $0x70] sm:$0xf]
        %v271 = vld [vmem:[%s235 + $0x74] sm:$0xf]
        %v272 = vld [vmem:[%s235 + $0x78] sm:$0xf]
        %v273 = vld [vmem:[%s235 + $0x7c] sm:$0xf]
        %v274 = vld [vmem:[%s2] sm:$0xff]
        %v275 = vld [vmem:[%s2 + $0x8] sm:$0xff]
        %v276 = vld [vmem:[%s2 + $0x10] sm:$0xff]
        %v277 = vld [vmem:[%s2 + $0x18] sm:$0xff]
        %v278 = vld [vmem:[%s2 + $0x20] sm:$0xff]
        %v279 = vld [vmem:[%s2 + $0x28] sm:$0xff]
        %v280 = vld [vmem:[%s3] sm:$0x3]
        %v282 = vlaneseq
        %v283 = vshrl.u32 %v282, 7
        %v284 = vsub.s32 0, %v283
        %v285 = vrot.slane %v280, %v284
        %v286 = vlaneseq
        %v287 = vshrl.u32 %v286, 7
        %v288 = vsub.s32 1, %v287
        %v289 = vrot.slane %v280, %v288
        %v324 = vunpack.c.l.b16 %v242
        %v325 = vunpack.c.l.b16 %v243
        %v326 = vunpack.c.l.b16 %v244
        %v327 = vunpack.c.l.b16 %v245
        %v328 = vunpack.c.l.b16 %v246
        %v329 = vunpack.c.l.b16 %v247
        %v330 = vunpack.c.l.b16 %v248
        %v331 = vunpack.c.l.b16 %v249
        %v332 = vunpack.c.l.b16 %v250
        %v333 = vunpack.c.l.b16 %v251
        %v334 = vunpack.c.l.b16 %v252
        %v335 = vunpack.c.l.b16 %v253
        %v336 = vunpack.c.l.b16 %v254
        %v337 = vunpack.c.l.b16 %v255
        %v338 = vunpack.c.l.b16 %v256
        %v339 = vunpack.c.l.b16 %v257
        %v340 = vunpack.c.l.b16 %v258
        %v341 = vunpack.c.l.b16 %v259
        %v342 = vunpack.c.l.b16 %v260
        %v343 = vunpack.c.l.b16 %v261
        %v344 = vunpack.c.l.b16 %v262
        %v345 = vunpack.c.l.b16 %v263
        %v346 = vunpack.c.l.b16 %v264
        %v347 = vunpack.c.l.b16 %v265
        %v348 = vunpack.c.l.b16 %v266
        %v349 = vunpack.c.l.b16 %v267
        %v350 = vunpack.c.l.b16 %v268
        %v351 = vunpack.c.l.b16 %v269
        %v352 = vunpack.c.l.b16 %v270
        %v353 = vunpack.c.l.b16 %v271
        %v354 = vunpack.c.l.b16 %v272
        %v355 = vunpack.c.l.b16 %v273
        %v356 = vpack.c.b16 %v325, %v324
        %v357 = vpack.c.b16 %v327, %v326
        %v358 = vpack.c.b16 %v329, %v328
        %v359 = vpack.c.b16 %v331, %v330
        %v360 = vpack.c.b16 %v333, %v332
        %v361 = vpack.c.b16 %v335, %v334
        %v362 = vpack.c.b16 %v337, %v336
        %v363 = vpack.c.b16 %v339, %v338
        %v364 = vpack.c.b16 %v341, %v340
        %v365 = vpack.c.b16 %v343, %v342
        %v366 = vpack.c.b16 %v345, %v344
        %v367 = vpack.c.b16 %v347, %v346
        %v368 = vpack.c.b16 %v349, %v348
        %v369 = vpack.c.b16 %v351, %v350
        %v370 = vpack.c.b16 %v353, %v352
        %v371 = vpack.c.b16 %v355, %v354
        %v378 = vunpack.c.l.b16 %v274
        %v379 = vunpack.c.h.b16 %v274
        %v380 = vunpack.c.l.b16 %v275
        %v381 = vunpack.c.h.b16 %v275
        %v382 = vunpack.c.l.b16 %v276
        %v383 = vunpack.c.h.b16 %v276
        %v384 = vunpack.c.l.b16 %v277
        %v385 = vunpack.c.h.b16 %v277
        %v386 = vunpack.c.l.b16 %v278
        %v387 = vunpack.c.h.b16 %v278
        %v388 = vunpack.c.l.b16 %v279
        %v389 = vunpack.c.h.b16 %v279
        %v390 = vpack.c.b16 %v380, %v378
        %v391 = vpack.c.b16 %v381, %v379
        %v392 = vpack.c.b16 %v384, %v382
        %v393 = vpack.c.b16 %v385, %v383
        %v394 = vpack.c.b16 %v388, %v386
        %v395 = vpack.c.b16 %v389, %v387
        %vm402 = vcmask 392192
        %v404 = vsel %vm402, %v356, 0
        %v407 = vsel %vm402, %v357, 0
        %v410 = vsel %vm402, %v358, 0
        %v413 = vsel %vm402, %v359, 0
        %v416 = vsel %vm402, %v360, 0
        %v419 = vsel %vm402, %v361, 0
        %v422 = vsel %vm402, %v362, 0
        %v425 = vsel %vm402, %v363, 0
        %v428 = vsel %vm402, %v364, 0
        %v431 = vsel %vm402, %v365, 0
        %v434 = vsel %vm402, %v366, 0
        %v437 = vsel %vm402, %v367, 0
        %v440 = vsel %vm402, %v368, 0
        %v443 = vsel %vm402, %v369, 0
        %v446 = vsel %vm402, %v370, 0
        %v449 = vsel %vm402, %v371, 0
        %451 = vmatprep.subr.bf16.mxu0 %v391
        %452 = vmatpush1.bf16.msra.mxu0 %v390
        %453 = vmatprep.subr.bf16.mxu0 %v393
        %454 = vmatpush1.bf16.msra.mxu0 %v392
        %455 = vmatprep.subr.bf16.mxu0 %v395
        %456 = vmatpush1.bf16.msra.mxu0 %v394
        %457 = vmatprep.subr.bf16.mxu0 0
        %458 = vmatpush1.bf16.msra.mxu0 0
        %459 = vmatprep.subr.bf16.mxu0 0
        %460 = vmatpush1.bf16.msra.mxu0 0
        %461 = vmatprep.subr.bf16.mxu0 0
        %462 = vmatpush1.bf16.msra.mxu0 0
        %463 = vmatprep.subr.bf16.mxu0 0
        %464 = vmatpush1.bf16.msra.mxu0 0
        %465 = vmatprep.subr.bf16.mxu0 0
        %466 = vmatpush1.bf16.msra.mxu0 0
        %467 = vmatprep.subr.bf16.mxu0 0
        %468 = vmatpush1.bf16.msra.mxu0 0
        %469 = vmatprep.subr.bf16.mxu0 0
        %470 = vmatpush1.bf16.msra.mxu0 0
        %471 = vmatprep.subr.bf16.mxu0 0
        %472 = vmatpush1.bf16.msra.mxu0 0
        %473 = vmatprep.subr.bf16.mxu0 0
        %474 = vmatpush1.bf16.msra.mxu0 0
        %475 = vmatprep.subr.bf16.mxu0 0
        %476 = vmatpush1.bf16.msra.mxu0 0
        %477 = vmatprep.subr.bf16.mxu0 0
        %478 = vmatpush1.bf16.msra.mxu0 0
        %479 = vmatprep.subr.bf16.mxu0 0
        %480 = vmatpush1.bf16.msra.mxu0 0
        %481 = vmatprep.subr.bf16.mxu0 0
        %482 = vmatpush1.bf16.msra.mxu0 0
        %483 = vmatprep.mubr.bf16.mxu0 0
        %484 = vmatmul.mubr.bf16.gmra.mrb[0].mxu0 %v404
        %v485 = vpop.f32.mrb[0].mxu0
        %v486 = vadd.f32 %v285, %v485
        %v487 = vpop.f32.mrb[0].mxu0
        %v488 = vadd.f32 %v289, %v487
        %v489 = vpop.f32.mrb[0].mxu0
        %v490 = vadd.f32 %v285, %v489
        %v491 = vpop.f32.mrb[0].mxu0
        %v492 = vadd.f32 %v289, %v491
        %493 = vmatprep.mubr.bf16.mxu0 0
        %494 = vmatmul.mubr.bf16.gmra.mrb[0].mxu0 %v407
        %v495 = vpop.f32.mrb[0].mxu0
        %v496 = vadd.f32 %v285, %v495
        %v497 = vpop.f32.mrb[0].mxu0
        %v498 = vadd.f32 %v289, %v497
        %v499 = vpop.f32.mrb[0].mxu0
        %v500 = vadd.f32 %v285, %v499
        %v501 = vpop.f32.mrb[0].mxu0
        %v502 = vadd.f32 %v289, %v501
        %503 = vmatprep.mubr.bf16.mxu0 0
        %504 = vmatmul.mubr.bf16.gmra.mrb[0].mxu0 %v410
        %v505 = vpop.f32.mrb[0].mxu0
        %v506 = vadd.f32 %v285, %v505
        %v507 = vpop.f32.mrb[0].mxu0
        %v508 = vadd.f32 %v289, %v507
        %v509 = vpop.f32.mrb[0].mxu0
        %v510 = vadd.f32 %v285, %v509
        %v511 = vpop.f32.mrb[0].mxu0
        %v512 = vadd.f32 %v289, %v511
        %513 = vmatprep.mubr.bf16.mxu0 0
        %514 = vmatmul.mubr.bf16.gmra.mrb[0].mxu0 %v413
        %v515 = vpop.f32.mrb[0].mxu0
        %v516 = vadd.f32 %v285, %v515
        %v517 = vpop.f32.mrb[0].mxu0
        %v518 = vadd.f32 %v289, %v517
        %v519 = vpop.f32.mrb[0].mxu0
        %v520 = vadd.f32 %v285, %v519
        %v521 = vpop.f32.mrb[0].mxu0
        %v522 = vadd.f32 %v289, %v521
        %523 = vmatprep.mubr.bf16.mxu0 0
        %524 = vmatmul.mubr.bf16.gmra.mrb[0].mxu0 %v416
        %v525 = vpop.f32.mrb[0].mxu0
        %v526 = vadd.f32 %v285, %v525
        %v527 = vpop.f32.mrb[0].mxu0
        %v528 = vadd.f32 %v289, %v527
        %v529 = vpop.f32.mrb[0].mxu0
        %v530 = vadd.f32 %v285, %v529
        %v531 = vpop.f32.mrb[0].mxu0
        %v532 = vadd.f32 %v289, %v531
        %533 = vmatprep.mubr.bf16.mxu0 0
        %534 = vmatmul.mubr.bf16.gmra.mrb[0].mxu0 %v419
        %v535 = vpop.f32.mrb[0].mxu0
        %v536 = vadd.f32 %v285, %v535
        %v537 = vpop.f32.mrb[0].mxu0
        %v538 = vadd.f32 %v289, %v537
        %v539 = vpop.f32.mrb[0].mxu0
        %v540 = vadd.f32 %v285, %v539
        %v541 = vpop.f32.mrb[0].mxu0
        %v542 = vadd.f32 %v289, %v541
        %543 = vmatprep.mubr.bf16.mxu0 0
        %544 = vmatmul.mubr.bf16.gmra.mrb[0].mxu0 %v422
        %v545 = vpop.f32.mrb[0].mxu0
        %v546 = vadd.f32 %v285, %v545
        %v547 = vpop.f32.mrb[0].mxu0
        %v548 = vadd.f32 %v289, %v547
        %v549 = vpop.f32.mrb[0].mxu0
        %v550 = vadd.f32 %v285, %v549
        %v551 = vpop.f32.mrb[0].mxu0
        %v552 = vadd.f32 %v289, %v551
        %553 = vmatprep.mubr.bf16.mxu0 0
        %554 = vmatmul.mubr.bf16.gmra.mrb[0].mxu0 %v425
        %v555 = vpop.f32.mrb[0].mxu0
        %v556 = vadd.f32 %v285, %v555
        %v557 = vpop.f32.mrb[0].mxu0
        %v558 = vadd.f32 %v289, %v557
        %v559 = vpop.f32.mrb[0].mxu0
        %v560 = vadd.f32 %v285, %v559
        %v561 = vpop.f32.mrb[0].mxu0
        %v562 = vadd.f32 %v289, %v561
        %563 = vmatprep.mubr.bf16.mxu0 0
        %564 = vmatmul.mubr.bf16.gmra.mrb[0].mxu0 %v428
        %v565 = vpop.f32.mrb[0].mxu0
        %v566 = vadd.f32 %v285, %v565
        %v567 = vpop.f32.mrb[0].mxu0
        %v568 = vadd.f32 %v289, %v567
        %v569 = vpop.f32.mrb[0].mxu0
        %v570 = vadd.f32 %v285, %v569
        %v571 = vpop.f32.mrb[0].mxu0
        %v572 = vadd.f32 %v289, %v571
        %573 = vmatprep.mubr.bf16.mxu0 0
        %574 = vmatmul.mubr.bf16.gmra.mrb[0].mxu0 %v431
        %v575 = vpop.f32.mrb[0].mxu0
        %v576 = vadd.f32 %v285, %v575
        %v577 = vpop.f32.mrb[0].mxu0
        %v578 = vadd.f32 %v289, %v577
        %v579 = vpop.f32.mrb[0].mxu0
        %v580 = vadd.f32 %v285, %v579
        %v581 = vpop.f32.mrb[0].mxu0
        %v582 = vadd.f32 %v289, %v581
        %583 = vmatprep.mubr.bf16.mxu0 0
        %584 = vmatmul.mubr.bf16.gmra.mrb[0].mxu0 %v434
        %v585 = vpop.f32.mrb[0].mxu0
        %v586 = vadd.f32 %v285, %v585
        %v587 = vpop.f32.mrb[0].mxu0
        %v588 = vadd.f32 %v289, %v587
        %v589 = vpop.f32.mrb[0].mxu0
        %v590 = vadd.f32 %v285, %v589
        %v591 = vpop.f32.mrb[0].mxu0
        %v592 = vadd.f32 %v289, %v591
        %593 = vmatprep.mubr.bf16.mxu0 0
        %594 = vmatmul.mubr.bf16.gmra.mrb[0].mxu0 %v437
        %v595 = vpop.f32.mrb[0].mxu0
        %v596 = vadd.f32 %v285, %v595
        %v597 = vpop.f32.mrb[0].mxu0
        %v598 = vadd.f32 %v289, %v597
        %v599 = vpop.f32.mrb[0].mxu0
        %v600 = vadd.f32 %v285, %v599
        %v601 = vpop.f32.mrb[0].mxu0
        %v602 = vadd.f32 %v289, %v601
        %603 = vmatprep.mubr.bf16.mxu0 0
        %604 = vmatmul.mubr.bf16.gmra.mrb[0].mxu0 %v440
        %v605 = vpop.f32.mrb[0].mxu0
        %v606 = vadd.f32 %v285, %v605
        %v607 = vpop.f32.mrb[0].mxu0
        %v608 = vadd.f32 %v289, %v607
        %v609 = vpop.f32.mrb[0].mxu0
        %v610 = vadd.f32 %v285, %v609
        %v611 = vpop.f32.mrb[0].mxu0
        %v612 = vadd.f32 %v289, %v611
        %613 = vmatprep.mubr.bf16.mxu0 0
        %614 = vmatmul.mubr.bf16.gmra.mrb[0].mxu0 %v443
        %v615 = vpop.f32.mrb[0].mxu0
        %v616 = vadd.f32 %v285, %v615
        %v617 = vpop.f32.mrb[0].mxu0
        %v618 = vadd.f32 %v289, %v617
        %v619 = vpop.f32.mrb[0].mxu0
        %v620 = vadd.f32 %v285, %v619
        %v621 = vpop.f32.mrb[0].mxu0
        %v622 = vadd.f32 %v289, %v621
        %623 = vmatprep.mubr.bf16.mxu0 0
        %624 = vmatmul.mubr.bf16.gmra.mrb[0].mxu0 %v446
        %v625 = vpop.f32.mrb[0].mxu0
        %v626 = vadd.f32 %v285, %v625
        %v627 = vpop.f32.mrb[0].mxu0
        %v628 = vadd.f32 %v289, %v627
        %v629 = vpop.f32.mrb[0].mxu0
        %v630 = vadd.f32 %v285, %v629
        %v631 = vpop.f32.mrb[0].mxu0
        %v632 = vadd.f32 %v289, %v631
        %633 = vmatprep.mubr.bf16.mxu0 0
        %634 = vmatmul.mubr.bf16.gmra.mrb[0].mxu0 %v449
        %v635 = vpop.f32.mrb[0].mxu0
        %v636 = vadd.f32 %v285, %v635
        %v637 = vpop.f32.mrb[0].mxu0
        %v638 = vadd.f32 %v289, %v637
        %v639 = vpop.f32.mrb[0].mxu0
        %v640 = vadd.f32 %v285, %v639
        %v641 = vpop.f32.mrb[0].mxu0
        %v642 = vadd.f32 %v289, %v641
        %643 = vdwg.mxu0
        %v644 = vmax.f32 %v486, 0.0
        %v645 = vmax.f32 %v488, 0.0
        %v646 = vmax.f32 %v490, 0.0
        %v647 = vmax.f32 %v492, 0.0
        %v648 = vmax.f32 %v496, 0.0
        %v649 = vmax.f32 %v498, 0.0
        %v650 = vmax.f32 %v500, 0.0
        %v651 = vmax.f32 %v502, 0.0
        %v652 = vmax.f32 %v506, 0.0
        %v653 = vmax.f32 %v508, 0.0
        %v654 = vmax.f32 %v510, 0.0
        %v655 = vmax.f32 %v512, 0.0
        %v656 = vmax.f32 %v516, 0.0
        %v657 = vmax.f32 %v518, 0.0
        %v658 = vmax.f32 %v520, 0.0
        %v659 = vmax.f32 %v522, 0.0
        %v660 = vmax.f32 %v526, 0.0
        %v661 = vmax.f32 %v528, 0.0
        %v662 = vmax.f32 %v530, 0.0
        %v663 = vmax.f32 %v532, 0.0
        %v664 = vmax.f32 %v536, 0.0
        %v665 = vmax.f32 %v538, 0.0
        %v666 = vmax.f32 %v540, 0.0
        %v667 = vmax.f32 %v542, 0.0
        %v668 = vmax.f32 %v546, 0.0
        %v669 = vmax.f32 %v548, 0.0
        %v670 = vmax.f32 %v550, 0.0
        %v671 = vmax.f32 %v552, 0.0
        %v672 = vmax.f32 %v556, 0.0
        %v673 = vmax.f32 %v558, 0.0
        %v674 = vmax.f32 %v560, 0.0
        %v675 = vmax.f32 %v562, 0.0
        %v676 = vmax.f32 %v566, 0.0
        %v677 = vmax.f32 %v568, 0.0
        %v678 = vmax.f32 %v570, 0.0
        %v679 = vmax.f32 %v572, 0.0
        %v680 = vmax.f32 %v576, 0.0
        %v681 = vmax.f32 %v578, 0.0
        %v682 = vmax.f32 %v580, 0.0
        %v683 = vmax.f32 %v582, 0.0
        %v684 = vmax.f32 %v586, 0.0
        %v685 = vmax.f32 %v588, 0.0
        %v686 = vmax.f32 %v590, 0.0
        %v687 = vmax.f32 %v592, 0.0
        %v688 = vmax.f32 %v596, 0.0
        %v689 = vmax.f32 %v598, 0.0
        %v690 = vmax.f32 %v600, 0.0
        %v691 = vmax.f32 %v602, 0.0
        %v692 = vmax.f32 %v606, 0.0
        %v693 = vmax.f32 %v608, 0.0
        %v694 = vmax.f32 %v610, 0.0
        %v695 = vmax.f32 %v612, 0.0
        %v696 = vmax.f32 %v616, 0.0
        %v697 = vmax.f32 %v618, 0.0
        %v698 = vmax.f32 %v620, 0.0
        %v699 = vmax.f32 %v622, 0.0
        %v700 = vmax.f32 %v626, 0.0
        %v701 = vmax.f32 %v628, 0.0
        %v702 = vmax.f32 %v630, 0.0
        %v703 = vmax.f32 %v632, 0.0
        %v704 = vmax.f32 %v636, 0.0
        %v705 = vmax.f32 %v638, 0.0
        %v706 = vmax.f32 %v640, 0.0
        %v707 = vmax.f32 %v642, 0.0
        %v708 = vadd.f32 %v644, %v645
        %v709 = vadd.f32 %v646, %v647
        %v710 = vadd.f32 %v648, %v649
        %v711 = vadd.f32 %v650, %v651
        %v712 = vadd.f32 %v652, %v653
        %v713 = vadd.f32 %v654, %v655
        %v714 = vadd.f32 %v656, %v657
        %v715 = vadd.f32 %v658, %v659
        %v716 = vadd.f32 %v660, %v661
        %v717 = vadd.f32 %v662, %v663
        %v718 = vadd.f32 %v664, %v665
        %v719 = vadd.f32 %v666, %v667
        %v720 = vadd.f32 %v668, %v669
        %v721 = vadd.f32 %v670, %v671
        %v722 = vadd.f32 %v672, %v673
        %v723 = vadd.f32 %v674, %v675
        %v724 = vadd.f32 %v676, %v677
        %v725 = vadd.f32 %v678, %v679
        %v726 = vadd.f32 %v680, %v681
        %v727 = vadd.f32 %v682, %v683
        %v728 = vadd.f32 %v684, %v685
        %v729 = vadd.f32 %v686, %v687
        %v730 = vadd.f32 %v688, %v689
        %v731 = vadd.f32 %v690, %v691
        %v732 = vadd.f32 %v692, %v693
        %v733 = vadd.f32 %v694, %v695
        %v734 = vadd.f32 %v696, %v697
        %v735 = vadd.f32 %v698, %v699
        %v736 = vadd.f32 %v700, %v701
        %v737 = vadd.f32 %v702, %v703
        %v738 = vadd.f32 %v704, %v705
        %v739 = vadd.f32 %v706, %v707
        %v740 = vld [vmem:[%s239] sm:$0x1]
        %v742 = vlaneseq
        %v743 = vshrl.u32 %v742, 7
        %v744 = vsub.s32 0, %v743
        %v745 = vrot.slane %v740, %v744
        %v747 = vadd.f32 %v708, %v745
        %v748 = vadd.f32 %v709, %v745
        %v749 = vadd.f32 %v710, %v745
        %v750 = vadd.f32 %v711, %v745
        %v751 = vadd.f32 %v712, %v745
        %v752 = vadd.f32 %v713, %v745
        %v753 = vadd.f32 %v714, %v745
        %v754 = vadd.f32 %v715, %v745
        %v755 = vadd.f32 %v716, %v745
        %v756 = vadd.f32 %v717, %v745
        %v757 = vadd.f32 %v718, %v745
        %v758 = vadd.f32 %v719, %v745
        %v759 = vadd.f32 %v720, %v745
        %v760 = vadd.f32 %v721, %v745
        %v761 = vadd.f32 %v722, %v745
        %v762 = vadd.f32 %v723, %v745
        %v763 = vadd.f32 %v724, %v745
        %v764 = vadd.f32 %v725, %v745
        %v765 = vadd.f32 %v726, %v745
        %v766 = vadd.f32 %v727, %v745
        %v767 = vadd.f32 %v728, %v745
        %v768 = vadd.f32 %v729, %v745
        %v769 = vadd.f32 %v730, %v745
        %v770 = vadd.f32 %v731, %v745
        %v771 = vadd.f32 %v732, %v745
        %v772 = vadd.f32 %v733, %v745
        %v773 = vadd.f32 %v734, %v745
        %v774 = vadd.f32 %v735, %v745
        %v775 = vadd.f32 %v736, %v745
        %v776 = vadd.f32 %v737, %v745
        %v777 = vadd.f32 %v738, %v745
        %v778 = vadd.f32 %v739, %v745
        %v779 = vpack.c.bf16 %v748, %v747
        %v780 = vpack.c.bf16 %v750, %v749
        %v781 = vpack.c.bf16 %v752, %v751
        %v782 = vpack.c.bf16 %v754, %v753
        %v783 = vpack.c.bf16 %v756, %v755
        %v784 = vpack.c.bf16 %v758, %v757
        %v785 = vpack.c.bf16 %v760, %v759
        %v786 = vpack.c.bf16 %v762, %v761
        %v787 = vpack.c.bf16 %v764, %v763
        %v788 = vpack.c.bf16 %v766, %v765
        %v789 = vpack.c.bf16 %v768, %v767
        %v790 = vpack.c.bf16 %v770, %v769
        %v791 = vpack.c.bf16 %v772, %v771
        %v792 = vpack.c.bf16 %v774, %v773
        %v793 = vpack.c.bf16 %v776, %v775
        %v794 = vpack.c.bf16 %v778, %v777
        %v811 = vunpack.c.l.b16 %v779
        %v812 = vunpack.c.h.b16 %v779
        %v813 = vunpack.c.l.b16 %v780
        %v814 = vunpack.c.h.b16 %v780
        %v815 = vunpack.c.l.b16 %v781
        %v816 = vunpack.c.h.b16 %v781
        %v817 = vunpack.c.l.b16 %v782
        %v818 = vunpack.c.h.b16 %v782
        %v819 = vunpack.c.l.b16 %v783
        %v820 = vunpack.c.h.b16 %v783
        %v821 = vunpack.c.l.b16 %v784
        %v822 = vunpack.c.h.b16 %v784
        %v823 = vunpack.c.l.b16 %v785
        %v824 = vunpack.c.h.b16 %v785
        %v825 = vunpack.c.l.b16 %v786
        %v826 = vunpack.c.h.b16 %v786
        %v827 = vunpack.c.l.b16 %v787
        %v828 = vunpack.c.h.b16 %v787
        %v829 = vunpack.c.l.b16 %v788
        %v830 = vunpack.c.h.b16 %v788
        %v831 = vunpack.c.l.b16 %v789
        %v832 = vunpack.c.h.b16 %v789
        %v833 = vunpack.c.l.b16 %v790
        %v834 = vunpack.c.h.b16 %v790
        %v835 = vunpack.c.l.b16 %v791
        %v836 = vunpack.c.h.b16 %v791
        %v837 = vunpack.c.l.b16 %v792
        %v838 = vunpack.c.h.b16 %v792
        %v839 = vunpack.c.l.b16 %v793
        %v840 = vunpack.c.h.b16 %v793
        %v841 = vunpack.c.l.b16 %v794
        %v842 = vunpack.c.h.b16 %v794
        %v843 = vpack.c.b16 %v811, %v811
        %v844 = vpack.c.b16 %v812, %v812
        %v845 = vpack.c.b16 %v813, %v813
        %v846 = vpack.c.b16 %v814, %v814
        %v847 = vpack.c.b16 %v815, %v815
        %v848 = vpack.c.b16 %v816, %v816
        %v849 = vpack.c.b16 %v817, %v817
        %v850 = vpack.c.b16 %v818, %v818
        %v851 = vpack.c.b16 %v819, %v819
        %v852 = vpack.c.b16 %v820, %v820
        %v853 = vpack.c.b16 %v821, %v821
        %v854 = vpack.c.b16 %v822, %v822
        %v855 = vpack.c.b16 %v823, %v823
        %v856 = vpack.c.b16 %v824, %v824
        %v857 = vpack.c.b16 %v825, %v825
        %v858 = vpack.c.b16 %v826, %v826
        %v859 = vpack.c.b16 %v827, %v827
        %v860 = vpack.c.b16 %v828, %v828
        %v861 = vpack.c.b16 %v829, %v829
        %v862 = vpack.c.b16 %v830, %v830
        %v863 = vpack.c.b16 %v831, %v831
        %v864 = vpack.c.b16 %v832, %v832
        %v865 = vpack.c.b16 %v833, %v833
        %v866 = vpack.c.b16 %v834, %v834
        %v867 = vpack.c.b16 %v835, %v835
        %v868 = vpack.c.b16 %v836, %v836
        %v869 = vpack.c.b16 %v837, %v837
        %v870 = vpack.c.b16 %v838, %v838
        %v871 = vpack.c.b16 %v839, %v839
        %v872 = vpack.c.b16 %v840, %v840
        %v873 = vpack.c.b16 %v841, %v841
        %v874 = vpack.c.b16 %v842, %v842
        %907 = vst [vmem:[%s226] sm:$0xf] %v843
        %908 = vst [vmem:[%s226 + $0x4] sm:$0xf] %v844
        %909 = vst [vmem:[%s226 + $0x8] sm:$0xf] %v845
        %910 = vst [vmem:[%s226 + $0xc] sm:$0xf] %v846
        %911 = vst [vmem:[%s226 + $0x10] sm:$0xf] %v847
        %912 = vst [vmem:[%s226 + $0x14] sm:$0xf] %v848
        %913 = vst [vmem:[%s226 + $0x18] sm:$0xf] %v849
        %914 = vst [vmem:[%s226 + $0x1c] sm:$0xf] %v850
        %915 = vst [vmem:[%s226 + $0x20] sm:$0xf] %v851
        %916 = vst [vmem:[%s226 + $0x24] sm:$0xf] %v852
        %917 = vst [vmem:[%s226 + $0x28] sm:$0xf] %v853
        %918 = vst [vmem:[%s226 + $0x2c] sm:$0xf] %v854
        %919 = vst [vmem:[%s226 + $0x30] sm:$0xf] %v855
        %920 = vst [vmem:[%s226 + $0x34] sm:$0xf] %v856
        %921 = vst [vmem:[%s226 + $0x38] sm:$0xf] %v857
        %922 = vst [vmem:[%s226 + $0x3c] sm:$0xf] %v858
        %923 = vst [vmem:[%s226 + $0x40] sm:$0xf] %v859
        %924 = vst [vmem:[%s226 + $0x44] sm:$0xf] %v860
        %925 = vst [vmem:[%s226 + $0x48] sm:$0xf] %v861
        %926 = vst [vmem:[%s226 + $0x4c] sm:$0xf] %v862
        %927 = vst [vmem:[%s226 + $0x50] sm:$0xf] %v863
        %928 = vst [vmem:[%s226 + $0x54] sm:$0xf] %v864
        %929 = vst [vmem:[%s226 + $0x58] sm:$0xf] %v865
        %930 = vst [vmem:[%s226 + $0x5c] sm:$0xf] %v866
        %931 = vst [vmem:[%s226 + $0x60] sm:$0xf] %v867
        %932 = vst [vmem:[%s226 + $0x64] sm:$0xf] %v868
        %933 = vst [vmem:[%s226 + $0x68] sm:$0xf] %v869
        %934 = vst [vmem:[%s226 + $0x6c] sm:$0xf] %v870
        %935 = vst [vmem:[%s226 + $0x70] sm:$0xf] %v871
        %936 = vst [vmem:[%s226 + $0x74] sm:$0xf] %v872
        %937 = vst [vmem:[%s226 + $0x78] sm:$0xf] %v873
        %938 = vst [vmem:[%s226 + $0x7c] sm:$0xf] %v874
        %s939 = sand.u32 %s136, 1
        %s940 = scalar_lea.sflag [#allocation3], %s939
        %s941 = sand.u32 %s136, 1
        %s942 = smul.addr %s941, 128
        %s943 = scalar_lea.vmem [#allocation2], %s942
        // Predicated region
        $region37: #{cem_forward.1} parent=35 // pred_check
          %p944 = pneg %p146
        $region38: #{cem_forward.1} parent=35 // pred_check_branch
          %946 = sbr.rel (%p944) target = $region40
        $region39: #{cem_forward.1} parent=35 // pred_region
          %s947 = smul.u32 32, %s23
          %s949 = ssub.s32 2048, 2048
          %950 = vsyncadd %s940, %s949
          %s951 = smul.addr %s22, 32
          %s952 = sadd.s32 %s947, %s951
          %s953 = smul.addr %s952, 64
          %s954 = scalar_lea.hbm %s4, %s953
          %s955 = sshll.u32 %s943, 4
          %s956 = int_to_ptr.vmem [resolvable:$true] %s955
          %961 = dma.vmem_to_hbm [thread:$0]  %s956, 2048, %s954, %s940, 64, 64, 4
        $region40: #{cem_forward.1} parent=35 // pred_fallthru
          _
      $region36: #{cem_forward.1} parent=5 // pred_fallthru
        _
      %p962 = scmp.le.s32.totalorder 2, %s13
      // Predicated region
      $region41: #{cem_forward.1} parent=5 // pred_check
        %p963 = pneg %p962
      $region42: #{cem_forward.1} parent=5 // pred_check_branch
        %965 = sbr.rel (%p963) target = $region44
      $region43: #{cem_forward.1} parent=5 // pred_region
        %s966 = ssub.s32 %s13, 2
        // Predicated region
        $region45: #{cem_forward.1} parent=43 // pred_check
          %p967 = pneg %p152
        $region46: #{cem_forward.1} parent=43 // pred_check_branch
          %969 = sbr.rel (%p967) target = $region48
        $region47: #{cem_forward.1} parent=43 // pred_region
          %s970 = sand.u32 %s137, 1
          %s971 = scalar_lea.sflag [#allocation3], %s970
          %s972 = sand.u32 %s137, 1
          %s973 = smul.addr %s972, 128
          %s974 = scalar_lea.vmem [#allocation2], %s973
          %975 = dma.done %s971, 2048
        $region48: #{cem_forward.1} parent=43 // pred_fallthru
          _
      $region44: #{cem_forward.1} parent=5 // pred_fallthru
        _
    $region6: #{cem_forward.1} parent=1 // loop_footer
      %s17 = sadd.s32 1, %s13
    $region7: #{cem_forward.1} parent=1 // loop_footer_branch
      %12 = sbr.rel target = $region3
    $region8: #{cem_forward.1} parent=1 // loop_exit
      _
    %976 = vsyncpa [#allocation3], 1
    %s977 = scalar_lea.sflag [#allocation3], 1
    %978 = vsyncpa %s977, 1

</llo_original>
